<compile_context>
chip_gen: v7x
topology: tpu7x:2x2x1
jax: 0.10.0
libtpu: 0.0.40
codegen_flags: <defaults>
</compile_context>

<pallas_src>
import functools

import jax
import jax.numpy as jnp
from jax.experimental import pallas as pl
from jax.experimental.pallas import tpu as pltpu

LANE = 128      # vreg lane width
SUBLANE = 8     # vreg sublane width (f32)


def _round_up(n, m):
    return ((n + m - 1) // m) * m


def perceptron_kernel(x_ref, w1_ref, b1_ref, w2_ref, o_ref):
    # In-kernel bf16 cast of the f32 activations (hidden under MXU latency).
    x_bf16 = x_ref[...].astype(jnp.bfloat16)
    # Layer 1: bf16 MXU matmul, f32 accumulation; bias + ReLU in f32 on the VPU.
    h = jnp.dot(x_bf16, w1_ref[...], preferred_element_type=jnp.float32)
    h = jnp.maximum(h + b1_ref[...], 0.0)          # broadcast [1, Hp] over rows
    # Layer 2: cast activations to bf16 for the MXU, accumulate in f32.
    y = jnp.dot(h.astype(jnp.bfloat16), w2_ref[...],
                preferred_element_type=jnp.float32)
    # Sigmoid in f32 (EUP), full-lane-width unmasked store.
    o_ref[...] = jax.nn.sigmoid(y).astype(o_ref.dtype)


def prepare_perceptron_params(w1, b1, w2):
    """Pad + bf16-cast the weights ONCE (module-init time, not per forward).

    Expects weights already transposed vs PyTorch:
      w1: [D_in, H], b1: [H] or [1, H], w2: [H, D_out]
    Returns (w1_p [Dp,Hp] bf16, b1_p [1,Hp] f32, w2_p [Hp,Op] bf16).
    """
    D_in, H = w1.shape
    D_out = w2.shape[1]
    Dp = _round_up(D_in, LANE)
    Hp = _round_up(H, LANE)
    Op = _round_up(D_out, LANE)

    w1_p = jnp.pad(w1.astype(jnp.bfloat16), ((0, Dp - D_in), (0, Hp - H)))
    b1_p = jnp.pad(jnp.reshape(b1.astype(jnp.float32), (1, H)),
                   ((0, 0), (0, Hp - H)))
    w2_p = jnp.pad(w2.astype(jnp.bfloat16), ((0, Hp - H), (0, Op - D_out)))
    return w1_p, b1_p, w2_p


@functools.partial(jax.jit, static_argnames=("d_out",))
def perceptron_forward(x, w1_p, b1_p, w2_p, *, d_out):
    """x: [B, D_in] (any float dtype). Weights must come from
    prepare_perceptron_params. Returns [B, d_out] in x.dtype
    (note: f32 accumulate -> x.dtype, so bf16 callers get one extra rounding).
    """
    B, D_in = x.shape
    Dp, Hp = w1_p.shape
    Op = w2_p.shape[1]
    Bp = _round_up(B, SUBLANE)

    # Single fused pad of the f32 activations (zero pad is exact for matmul).
    x_p = jnp.pad(x.astype(jnp.float32), ((0, Bp - B), (0, Dp - D_in)))

    cost = pl.CostEstimate(
        flops=2 * Bp * (Dp * Hp + Hp * Op),
        transcendentals=Bp * Op,                      # sigmoid
        bytes_accessed=(x_p.size * 4 + w1_p.size * 2 + b1_p.size * 4
                        + w2_p.size * 2 + Bp * Op * 4),
    )

    vmem_spec = functools.partial(
        pl.BlockSpec, memory_space=pltpu.MemorySpace.VMEM)

    out_p = pl.pallas_call(
        perceptron_kernel,
        out_shape=jax.ShapeDtypeStruct((Bp, Op), jnp.float32),
        in_specs=[vmem_spec(), vmem_spec(), vmem_spec(), vmem_spec()],
        out_specs=vmem_spec(),
        cost_estimate=cost,
    )(x_p, w1_p, b1_p, w2_p)

    # Padded lanes hold sigmoid(0)=0.5 -- must slice before use.
    return out_p[:B, :d_out].astype(x.dtype)


if __name__ == "__main__":
    # Small shapes consistent with the module's forward.
    batch = 8
    input_dimension = 32
    hidden_dimension = 64
    output_dimension = 16

    key = jax.random.PRNGKey(0)
    kx, kw1, kb1, kw2 = jax.random.split(key, 4)

    # Deterministic inputs + PyTorch-style uniform init (bound 1/sqrt(fan_in)).
    x = jax.random.normal(kx, (batch, input_dimension), dtype=jnp.float32)
    bound1 = 1.0 / (input_dimension ** 0.5)
    w1 = jax.random.uniform(kw1, (input_dimension, hidden_dimension),
                            minval=-bound1, maxval=bound1, dtype=jnp.float32)
    b1 = jax.random.uniform(kb1, (1, hidden_dimension),
                            minval=-bound1, maxval=bound1, dtype=jnp.float32)
    bound2 = 1.0 / (hidden_dimension ** 0.5)
    w2 = jax.random.uniform(kw2, (hidden_dimension, output_dimension),
                            minval=-bound2, maxval=bound2, dtype=jnp.float32)

    # One-time weight prep (module init), then the jitted per-call forward.
    w1_p, b1_p, w2_p = prepare_perceptron_params(w1, b1, w2)
    w1_p, b1_p, w2_p = jax.block_until_ready((w1_p, b1_p, w2_p))

    out = perceptron_forward(x, w1_p, b1_p, w2_p, d_out=output_dimension)
    out = jax.block_until_ready(out)
    assert out.shape == (batch, output_dimension)

    # Reference 1: same bf16-on-MXU / f32-accumulate recipe in plain JAX (tight).
    h_ref = jnp.maximum(
        jnp.dot(x.astype(jnp.bfloat16), w1.astype(jnp.bfloat16),
                preferred_element_type=jnp.float32) + b1, 0.0)
    ref_bf16 = jax.nn.sigmoid(
        jnp.dot(h_ref.astype(jnp.bfloat16), w2.astype(jnp.bfloat16),
                preferred_element_type=jnp.float32))
    assert jnp.allclose(out, ref_bf16, atol=2e-3, rtol=2e-3)

    # Reference 2: full-f32 PyTorch-equivalent forward (loose, bf16 rounding).
    ref_f32 = jax.nn.sigmoid(jnp.maximum(x @ w1 + b1, 0.0) @ w2)
    assert jnp.allclose(out, ref_f32, atol=2e-2, rtol=2e-2)

    print("KERNEL_OK")
</pallas_src>

<mosaic_0001>
module attributes {stable_mosaic.version = 11 : i64} {
  func.func @perceptron_kernel(%arg0: memref<8x128xf32, #tpu.memory_space<vmem>>, %arg1: memref<128x128xbf16, #tpu.memory_space<vmem>>, %arg2: memref<1x128xf32, #tpu.memory_space<vmem>>, %arg3: memref<128x128xbf16, #tpu.memory_space<vmem>>, %arg4: memref<8x128xf32, #tpu.memory_space<vmem>>) attributes {dimension_semantics = [], scalar_prefetch = 0 : i64, scratch_operands = 0 : i64, tpu.core_type = #tpu.core_type<tc>} {
    %c0 = arith.constant 0 : index
    %c0_0 = arith.constant 0 : index
    %0 = vector.load %arg0[%c0, %c0_0] : memref<8x128xf32, #tpu.memory_space<vmem>>, vector<8x128xf32>
    %1 = arith.truncf %0 : vector<8x128xf32> to vector<8x128xbf16>
    %c0_1 = arith.constant 0 : index
    %c0_2 = arith.constant 0 : index
    %2 = vector.load %arg1[%c0_1, %c0_2] : memref<128x128xbf16, #tpu.memory_space<vmem>>, vector<128x128xbf16>
    %cst = arith.constant dense<0.000000e+00> : vector<8x128xf32>
    %3 = tpu.matmul %1, %2, %cst {dimension_numbers = #tpu.dot_dimension_numbers<[1], [0], [0], [1], [0, 0, 1, 1], [], []>} : vector<8x128xbf16>, vector<128x128xbf16>, vector<8x128xf32> -> vector<8x128xf32>
    %c0_3 = arith.constant 0 : index
    %c0_4 = arith.constant 0 : index
    %4 = vector.load %arg2[%c0_3, %c0_4] : memref<1x128xf32, #tpu.memory_space<vmem>>, vector<1x128xf32>
    %5 = vector.broadcast %4 : vector<1x128xf32> to vector<8x128xf32>
    %6 = arith.addf %3, %5 : vector<8x128xf32>
    %cst_5 = arith.constant 0.000000e+00 : f32
    %7 = vector.broadcast %cst_5 : f32 to vector<8x128xf32>
    %8 = arith.maximumf %6, %7 : vector<8x128xf32>
    %9 = arith.truncf %8 : vector<8x128xf32> to vector<8x128xbf16>
    %c0_6 = arith.constant 0 : index
    %c0_7 = arith.constant 0 : index
    %10 = vector.load %arg3[%c0_6, %c0_7] : memref<128x128xbf16, #tpu.memory_space<vmem>>, vector<128x128xbf16>
    %cst_8 = arith.constant dense<0.000000e+00> : vector<8x128xf32>
    %11 = tpu.matmul %9, %10, %cst_8 {dimension_numbers = #tpu.dot_dimension_numbers<[1], [0], [0], [1], [0, 0, 1, 1], [], []>} : vector<8x128xbf16>, vector<128x128xbf16>, vector<8x128xf32> -> vector<8x128xf32>
    %12 = arith.negf %11 : vector<8x128xf32>
    %13 = math.exp %12 : vector<8x128xf32>
    %cst_9 = arith.constant 1.000000e+00 : f32
    %14 = vector.broadcast %cst_9 : f32 to vector<8x128xf32>
    %15 = arith.addf %14, %13 : vector<8x128xf32>
    %16 = arith.divf %14, %15 : vector<8x128xf32>
    %c0_10 = arith.constant 0 : index
    %c0_11 = arith.constant 0 : index
    %17 = vector.load %arg4[%c0_10, %c0_11] : memref<8x128xf32, #tpu.memory_space<vmem>>, vector<8x128xf32>
    tpu.vector_store %arg4[%c0_10, %c0_11], %16 {strides = array<i32>} : memref<8x128xf32, #tpu.memory_space<vmem>>, vector<8x128xf32>,
    return
  }
}

</mosaic_0001>

<llo_original>
// kernel: perceptron_forward.1
$region0: #{perceptron_forward.1}
  #allocation0 [shape = 'u32[]', space=smem, size = 0x4, offset = 0x4, fixed_abs, tag = 'smem constant byte address 0x4 - core index']
  #allocation1 [shape = 'u32[144,128]{1,0:T(1,128)}', space=vmem, size = 0x12000, scoped, tag = 'internal scratch']
  %s0 = inlined_call_operand.vmem [shape: f32[8,128], index: 0, kind: input, shape index: {}]
  %s1 = inlined_call_operand.hbm [shape: bf16[128,128], index: 1, kind: input, shape index: {}]
  %s2 = inlined_call_operand.vmem [shape: f32[1,128], index: 2, kind: input, shape index: {}]
  %s3 = inlined_call_operand.hbm [shape: bf16[128,128], index: 3, kind: input, shape index: {}]
  %s4 = inlined_call_operand.hbm [shape: f32[8,128], index: 4, kind: output, shape index: {}]
  %s5 = sld [smem:[#allocation0]]
  $region34: #{perceptron_forward.1} parent=0
    _
  %s7 = ssub.s32 1, %s5
  %s8 = scalar_select 0, %s7, %s5
  $region1: #{perceptron_forward.1} parent=0
    #allocation2 [shape = 'u8[32768]{0}', space=vmem, size = 0x8000, scoped, tag = 'input window, operand 1, single buffered']
    #allocation3 [shape = 's32[1]{0}', space=sflag, size = 0x4, scoped, tag = 'scoped memory for perceptron_forward.1']
    #allocation4 [shape = 's32[1]{0}', space=sflag, size = 0x4, scoped, tag = 'scoped memory for perceptron_forward.1']
    #allocation5 [shape = 'u8[32768]{0}', space=vmem, size = 0x8000, scoped, tag = 'input window, operand 3, single buffered']
    #allocation6 [shape = 's32[1]{0}', space=sflag, size = 0x4, scoped, tag = 'scoped memory for perceptron_forward.1']
    #allocation7 [shape = 'u8[4096]{0}', space=vmem, size = 0x1000, scoped, tag = 'output window, operand 0, single buffered']
    %9 = vsyncpa [#allocation3], 0
    %10 = vsyncpa [#allocation6], 0
    %11 = vsyncpa [#allocation4], 0
    // Predicated region
    $region2: #{perceptron_forward.1} parent=1 // pred_check
      _
    $region3: #{perceptron_forward.1} parent=1 // pred_check_branch
      %13 = sbr.rel (0) target = $region5
    $region4: #{perceptron_forward.1} parent=1 // pred_region
      _
    $region5: #{perceptron_forward.1} parent=1 // pred_fallthru
      _
    // Predicated region
    $region6: #{perceptron_forward.1} parent=1 // pred_check
      _
    $region7: #{perceptron_forward.1} parent=1 // pred_check_branch
      %15 = sbr.rel (0) target = $region9
    $region8: #{perceptron_forward.1} parent=1 // pred_region
      %s17 = ssub.s32 1024, 1024
      %18 = vsyncadd [#allocation3], %s17
      %s19 = sshll.u32 [#allocation2], 4
      %s20 = int_to_ptr.vmem [resolvable:$true] %s19
      %25 = dma.hbm_to_vmem [thread:$0]  %s1, 1024, %s20, [#allocation3], 64, 64, 4
    $region9: #{perceptron_forward.1} parent=1 // pred_fallthru
      _
    // Predicated region
    $region10: #{perceptron_forward.1} parent=1 // pred_check
      _
    $region11: #{perceptron_forward.1} parent=1 // pred_check_branch
      %27 = sbr.rel (0) target = $region13
    $region12: #{perceptron_forward.1} parent=1 // pred_region
      _
    $region13: #{perceptron_forward.1} parent=1 // pred_fallthru
      _
    // Predicated region
    $region14: #{perceptron_forward.1} parent=1 // pred_check
      _
    $region15: #{perceptron_forward.1} parent=1 // pred_check_branch
      %29 = sbr.rel (0) target = $region17
    $region16: #{perceptron_forward.1} parent=1 // pred_region
      %s31 = ssub.s32 1024, 1024
      %32 = vsyncadd [#allocation6], %s31
      %s33 = sshll.u32 [#allocation5], 4
      %s34 = int_to_ptr.vmem [resolvable:$true] %s33
      %39 = dma.hbm_to_vmem [thread:$0]  %s3, 1024, %s34, [#allocation6], 64, 64, 4
    $region17: #{perceptron_forward.1} parent=1 // pred_fallthru
      _
    // Predicated region
    $region18: #{perceptron_forward.1} parent=1 // pred_check
      _
    $region19: #{perceptron_forward.1} parent=1 // pred_check_branch
      %41 = sbr.rel (0) target = $region21
    $region20: #{perceptron_forward.1} parent=1 // pred_region
      %42 = dma.done [#allocation3], 1024
    $region21: #{perceptron_forward.1} parent=1 // pred_fallthru
      _
    // Predicated region
    $region22: #{perceptron_forward.1} parent=1 // pred_check
      _
    $region23: #{perceptron_forward.1} parent=1 // pred_check_branch
      %44 = sbr.rel (0) target = $region25
    $region24: #{perceptron_forward.1} parent=1 // pred_region
      %45 = dma.done [#allocation6], 1024
    $region25: #{perceptron_forward.1} parent=1 // pred_fallthru
      _
    %v47 = vld [vmem:[%s0] sm:$0xff]
    %v48 = vpack.c.bf16 %v47, %v47
    %v49 = vld [vmem:[#allocation2] sm:$0xf]
    %v50 = vld [vmem:[#allocation2 + $0x4] sm:$0xf]
    %v51 = vld [vmem:[#allocation2 + $0x8] sm:$0xf]
    %v52 = vld [vmem:[#allocation2 + $0xc] sm:$0xf]
    %v53 = vld [vmem:[#allocation2 + $0x10] sm:$0xf]
    %v54 = vld [vmem:[#allocation2 + $0x14] sm:$0xf]
    %v55 = vld [vmem:[#allocation2 + $0x18] sm:$0xf]
    %v56 = vld [vmem:[#allocation2 + $0x1c] sm:$0xf]
    %v57 = vld [vmem:[#allocation2 + $0x20] sm:$0xf]
    %v58 = vld [vmem:[#allocation2 + $0x24] sm:$0xf]
    %v59 = vld [vmem:[#allocation2 + $0x28] sm:$0xf]
    %v60 = vld [vmem:[#allocation2 + $0x2c] sm:$0xf]
    %v61 = vld [vmem:[#allocation2 + $0x30] sm:$0xf]
    %v62 = vld [vmem:[#allocation2 + $0x34] sm:$0xf]
    %v63 = vld [vmem:[#allocation2 + $0x38] sm:$0xf]
    %v64 = vld [vmem:[#allocation2 + $0x3c] sm:$0xf]
    %v65 = vld [vmem:[%s2] sm:$0x1]
    %v67 = vlaneseq
    %v68 = vshrl.u32 %v67, 7
    %v69 = vsub.s32 0, %v68
    %v70 = vrot.slane %v65, %v69
    %v88 = vunpack.c.l.b16 %v49
    %v89 = vunpack.c.l.b16 %v50
    %v90 = vunpack.c.l.b16 %v51
    %v91 = vunpack.c.l.b16 %v52
    %v92 = vunpack.c.l.b16 %v53
    %v93 = vunpack.c.l.b16 %v54
    %v94 = vunpack.c.l.b16 %v55
    %v95 = vunpack.c.l.b16 %v56
    %v96 = vunpack.c.l.b16 %v57
    %v97 = vunpack.c.l.b16 %v58
    %v98 = vunpack.c.l.b16 %v59
    %v99 = vunpack.c.l.b16 %v60
    %v100 = vunpack.c.l.b16 %v61
    %v101 = vunpack.c.l.b16 %v62
    %v102 = vunpack.c.l.b16 %v63
    %v103 = vunpack.c.l.b16 %v64
    %v104 = vpack.c.b16 %v89, %v88
    %v105 = vpack.c.b16 %v91, %v90
    %v106 = vpack.c.b16 %v93, %v92
    %v107 = vpack.c.b16 %v95, %v94
    %v108 = vpack.c.b16 %v97, %v96
    %v109 = vpack.c.b16 %v99, %v98
    %v110 = vpack.c.b16 %v101, %v100
    %v111 = vpack.c.b16 %v103, %v102
    %120 = vmatprep.subr.bf16.mxu0 0
    %121 = vmatpush1.bf16.msra.mxu0 %v104
    %122 = vmatprep.subr.bf16.mxu0 0
    %123 = vmatpush1.bf16.msra.mxu0 %v105
    %124 = vmatprep.subr.bf16.mxu0 0
    %125 = vmatpush1.bf16.msra.mxu0 %v106
    %126 = vmatprep.subr.bf16.mxu0 0
    %127 = vmatpush1.bf16.msra.mxu0 %v107
    %128 = vmatprep.subr.bf16.mxu0 0
    %129 = vmatpush1.bf16.msra.mxu0 %v108
    %130 = vmatprep.subr.bf16.mxu0 0
    %131 = vmatpush1.bf16.msra.mxu0 %v109
    %132 = vmatprep.subr.bf16.mxu0 0
    %133 = vmatpush1.bf16.msra.mxu0 %v110
    %134 = vmatprep.subr.bf16.mxu0 0
    %135 = vmatpush1.bf16.msra.mxu0 %v111
    %136 = vmatprep.subr.bf16.mxu0 0
    %137 = vmatpush1.bf16.msra.mxu0 0
    %138 = vmatprep.subr.bf16.mxu0 0
    %139 = vmatpush1.bf16.msra.mxu0 0
    %140 = vmatprep.subr.bf16.mxu0 0
    %141 = vmatpush1.bf16.msra.mxu0 0
    %142 = vmatprep.subr.bf16.mxu0 0
    %143 = vmatpush1.bf16.msra.mxu0 0
    %144 = vmatprep.subr.bf16.mxu0 0
    %145 = vmatpush1.bf16.msra.mxu0 0
    %146 = vmatprep.subr.bf16.mxu0 0
    %147 = vmatpush1.bf16.msra.mxu0 0
    %148 = vmatprep.subr.bf16.mxu0 0
    %149 = vmatpush1.bf16.msra.mxu0 0
    %150 = vmatprep.subr.bf16.mxu0 0
    %151 = vmatpush1.bf16.msra.mxu0 0
    %152 = vmatprep.mubr.bf16.mxu0 0
    %153 = vmatmul.mubr.bf16.gmra.mrb[0].mxu0 %v48
    %v154 = vpop.f32.mrb[0].mxu0
    %v155 = vadd.f32 %v70, %v154
    %v156 = vpop.f32.mrb[0].mxu0
    %v157 = vpop.f32.mrb[0].mxu0
    %v158 = vpop.f32.mrb[0].mxu0
    %159 = vdwg.mxu0
    %v160 = vmax.f32 %v155, 0.0
    %v161 = vpack.c.bf16 %v160, %v160
    %v162 = vld [vmem:[#allocation5] sm:$0xf]
    %v163 = vld [vmem:[#allocation5 + $0x4] sm:$0xf]
    %v164 = vld [vmem:[#allocation5 + $0x8] sm:$0xf]
    %v165 = vld [vmem:[#allocation5 + $0xc] sm:$0xf]
    %v166 = vld [vmem:[#allocation5 + $0x10] sm:$0xf]
    %v167 = vld [vmem:[#allocation5 + $0x14] sm:$0xf]
    %v168 = vld [vmem:[#allocation5 + $0x18] sm:$0xf]
    %v169 = vld [vmem:[#allocation5 + $0x1c] sm:$0xf]
    %v170 = vld [vmem:[#allocation5 + $0x20] sm:$0xf]
    %v171 = vld [vmem:[#allocation5 + $0x24] sm:$0xf]
    %v172 = vld [vmem:[#allocation5 + $0x28] sm:$0xf]
    %v173 = vld [vmem:[#allocation5 + $0x2c] sm:$0xf]
    %v174 = vld [vmem:[#allocation5 + $0x30] sm:$0xf]
    %v175 = vld [vmem:[#allocation5 + $0x34] sm:$0xf]
    %v176 = vld [vmem:[#allocation5 + $0x38] sm:$0xf]
    %v177 = vld [vmem:[#allocation5 + $0x3c] sm:$0xf]
    %v194 = vunpack.c.l.b16 %v162
    %v195 = vunpack.c.l.b16 %v163
    %v196 = vunpack.c.l.b16 %v164
    %v197 = vunpack.c.l.b16 %v165
    %v198 = vunpack.c.l.b16 %v166
    %v199 = vunpack.c.l.b16 %v167
    %v200 = vunpack.c.l.b16 %v168
    %v201 = vunpack.c.l.b16 %v169
    %v202 = vunpack.c.l.b16 %v170
    %v203 = vunpack.c.l.b16 %v171
    %v204 = vunpack.c.l.b16 %v172
    %v205 = vunpack.c.l.b16 %v173
    %v206 = vunpack.c.l.b16 %v174
    %v207 = vunpack.c.l.b16 %v175
    %v208 = vunpack.c.l.b16 %v176
    %v209 = vunpack.c.l.b16 %v177
    %v210 = vpack.c.b16 %v195, %v194
    %v211 = vpack.c.b16 %v197, %v196
    %v212 = vpack.c.b16 %v199, %v198
    %v213 = vpack.c.b16 %v201, %v200
    %v214 = vpack.c.b16 %v203, %v202
    %v215 = vpack.c.b16 %v205, %v204
    %v216 = vpack.c.b16 %v207, %v206
    %v217 = vpack.c.b16 %v209, %v208
    %226 = vmatprep.subr.bf16.mxu0 0
    %227 = vmatpush1.bf16.msra.mxu0 %v210
    %228 = vmatprep.subr.bf16.mxu0 0
    %229 = vmatpush1.bf16.msra.mxu0 %v211
    %230 = vmatprep.subr.bf16.mxu0 0
    %231 = vmatpush1.bf16.msra.mxu0 %v212
    %232 = vmatprep.subr.bf16.mxu0 0
    %233 = vmatpush1.bf16.msra.mxu0 %v213
    %234 = vmatprep.subr.bf16.mxu0 0
    %235 = vmatpush1.bf16.msra.mxu0 %v214
    %236 = vmatprep.subr.bf16.mxu0 0
    %237 = vmatpush1.bf16.msra.mxu0 %v215
    %238 = vmatprep.subr.bf16.mxu0 0
    %239 = vmatpush1.bf16.msra.mxu0 %v216
    %240 = vmatprep.subr.bf16.mxu0 0
    %241 = vmatpush1.bf16.msra.mxu0 %v217
    %242 = vmatprep.subr.bf16.mxu0 0
    %243 = vmatpush1.bf16.msra.mxu0 0
    %244 = vmatprep.subr.bf16.mxu0 0
    %245 = vmatpush1.bf16.msra.mxu0 0
    %246 = vmatprep.subr.bf16.mxu0 0
    %247 = vmatpush1.bf16.msra.mxu0 0
    %248 = vmatprep.subr.bf16.mxu0 0
    %249 = vmatpush1.bf16.msra.mxu0 0
    %250 = vmatprep.subr.bf16.mxu0 0
    %251 = vmatpush1.bf16.msra.mxu0 0
    %252 = vmatprep.subr.bf16.mxu0 0
    %253 = vmatpush1.bf16.msra.mxu0 0
    %254 = vmatprep.subr.bf16.mxu0 0
    %255 = vmatpush1.bf16.msra.mxu0 0
    %256 = vmatprep.subr.bf16.mxu0 0
    %257 = vmatpush1.bf16.msra.mxu0 0
    %258 = vmatprep.mubr.bf16.mxu0 0
    %259 = vmatmul.mubr.bf16.gmra.mrb[0].mxu0 %v161
    %v260 = vpop.f32.mrb[0].mxu0
    %v261 = vadd.f32 0.0, %v260
    %v262 = vpop.f32.mrb[0].mxu0
    %v263 = vpop.f32.mrb[0].mxu0
    %v264 = vpop.f32.mrb[0].mxu0
    %265 = vdwg.mxu0
    %v266 = vxor.u32 %v261, 2147483648
    %v267 = vmul.f32 %v266, 1.442695
    %v268 = vpow.pop %v267
    %v269 = vadd.f32 %v268, 1.0
    %v270 = vrcp.pop %v269
    %v271 = vmul.f32 1.0, %v270
    %272 = vst [vmem:[#allocation7] sm:$0xff] %v271
    // Predicated region
    $region26: #{perceptron_forward.1} parent=1 // pred_check
      _
    $region27: #{perceptron_forward.1} parent=1 // pred_check_branch
      %274 = sbr.rel (0) target = $region29
    $region28: #{perceptron_forward.1} parent=1 // pred_region
      %s276 = ssub.s32 128, 128
      %277 = vsyncadd [#allocation4], %s276
      %s279 = sshll.u32 [#allocation7], 4
      %s280 = int_to_ptr.vmem [resolvable:$true] %s279
      %282 = dma.vmem_to_hbm [thread:$0]  %s280, 128, %s4, [#allocation4]
    $region29: #{perceptron_forward.1} parent=1 // pred_fallthru
      _
    // Predicated region
    $region30: #{perceptron_forward.1} parent=1 // pred_check
      _
    $region31: #{perceptron_forward.1} parent=1 // pred_check_branch
      %284 = sbr.rel (0) target = $region33
    $region32: #{perceptron_forward.1} parent=1 // pred_region
      %285 = dma.done [#allocation4], 128
    $region33: #{perceptron_forward.1} parent=1 // pred_fallthru
      _
    %286 = vsyncpa [#allocation3], 1
    %287 = vsyncpa [#allocation6], 1
    %288 = vsyncpa [#allocation4], 1

</llo_original>
